<compile_context>
chip_gen: v7x
topology: tpu7x:2x2x1
jax: 0.10.0
libtpu: 0.0.40
codegen_flags: <defaults>
</compile_context>

<pallas_src>
import jax
import jax.numpy as jnp
from jax.experimental import pallas as pl
from jax.experimental.pallas import tpu as pltpu


def _ce_partial_kernel(logits_ref, labels_ref, out_ref, acc_ref):
    """Accumulate the sum of per-example CE for this core's batch slice.

    grid = (P, tiles_per_core); axis 0 "parallel" (one partial per slice/TC),
    axis 1 "arbitrary" (reduction over batch tiles).
    """
    i = pl.program_id(1)

    @pl.when(i == 0)
    def _():
        acc_ref[...] = jnp.zeros_like(acc_ref)

    x = logits_ref[...].astype(jnp.float32)           # (TB, C)
    labels = labels_ref[...]                          # (TB, 1) int32; -1 => pad

    # numerically-stable log-sum-exp over the class (lane) axis
    m = jnp.max(x, axis=-1, keepdims=True)            # (TB, 1)
    lse = m + jnp.log(jnp.sum(jnp.exp(x - m), axis=-1, keepdims=True))

    # gather the logit at the label index via iota one-hot (no dynamic gather)
    col = jax.lax.broadcasted_iota(jnp.int32, x.shape, 1)
    label_logit = jnp.sum(jnp.where(col == labels, x, 0.0),
                          axis=-1, keepdims=True)     # (TB, 1)

    per_example = jnp.where(labels >= 0, lse - label_logit, 0.0)  # mask pad rows

    # scalar broadcast-add into the lane-dense scratch
    acc_ref[...] += jnp.sum(per_example)

    @pl.when(i == pl.num_programs(1) - 1)
    def _():
        out_ref[...] = acc_ref[...]                   # single lane-dense write


class CustomLossFunction:
    """JAX/Pallas port of the PyTorch CustomLossFunction (softmax cross-entropy)."""

    def __init__(self, num_classes: int, *, max_tile_rows: int = 2048) -> None:
        self.num_classes = num_classes
        self.max_tile_rows = max_tile_rows  # cap on batch rows per grid step

    def __call__(self, logits: jax.Array, labels: jax.Array) -> jax.Array:
        n, c = logits.shape
        assert c == self.num_classes
        itemsize = jnp.dtype(logits.dtype).itemsize

        # ---- generation-aware VMEM budget ---------------------------------
        try:
            vmem_phys = int(pltpu.get_tpu_info().vmem_capacity_bytes)
        except Exception:
            vmem_phys = 64 * 1024 * 1024             # conservative (v7x per-TC)
        vmem_limit = int(min((vmem_phys * 3) // 4, 96 * 1024 * 1024))

        # ---- batch tile: biggest 8-aligned tile whose double-buffered logits
        # block (plus labels + scratch headroom) fits the budget -------------
        per_buf_budget = vmem_limit // 6
        tb = per_buf_budget // max(c * itemsize, 1)
        tb = max(8, min((tb // 8) * 8, self.max_tile_rows, ((n + 7) // 8) * 8))

        n_tiles = -(-n // tb)                         # cdiv
        num_parallel = 2 if n_tiles >= 2 else 1       # shards across TCs on v7x
        tiles_per_core = -(-n_tiles // num_parallel)
        n_pad = num_parallel * tiles_per_core * tb

        labels2d = labels.reshape(n, 1).astype(jnp.int32)
        if n_pad != n:
            logits = jnp.pad(logits, ((0, n_pad - n), (0, 0)))
            labels2d = jnp.pad(labels2d, ((0, n_pad - n), (0, 0)),
                               constant_values=-1)

        row_map = lambda p, i: (p * tiles_per_core + i, 0)

        partials = pl.pallas_call(
            _ce_partial_kernel,
            out_shape=jax.ShapeDtypeStruct((1, 128 * num_parallel), jnp.float32),
            grid_spec=pltpu.PrefetchScalarGridSpec(
                num_scalar_prefetch=0,
                grid=(num_parallel, tiles_per_core),
                in_specs=[
                    pl.BlockSpec((tb, c), row_map),   # logits tile
                    pl.BlockSpec((tb, 1), row_map),   # labels tile
                ],
                out_specs=pl.BlockSpec((1, 128), lambda p, i: (0, p)),
                scratch_shapes=[pltpu.VMEM((1, 128), jnp.float32)],
            ),
            compiler_params=pltpu.CompilerParams(
                dimension_semantics=("parallel", "arbitrary"),
                vmem_limit_bytes=vmem_limit,
            ),
            cost_estimate=pl.CostEstimate(
                flops=int(5 * n_pad * c),
                transcendentals=int(n_pad * c),
                bytes_accessed=int(n_pad * c * itemsize + n_pad * 4
                                   + 128 * num_parallel * 4),
            ),
        )(logits, labels2d)

        # one partial per parallel slice lives in lane 0 of its 128-lane slab
        total = jnp.sum(partials[0, ::128])
        return total / jnp.float32(n)


def _reference(logits, labels):
    logits = logits.astype(jnp.float32)
    lse = jax.scipy.special.logsumexp(logits, axis=-1)
    label_logit = jnp.take_along_axis(logits, labels[:, None], axis=-1)[:, 0]
    return jnp.mean(lse - label_logit)


if __name__ == "__main__":
    num_classes = 32
    batch = 50  # deliberately not a multiple of 8 -> exercises padding + mask

    key = jax.random.PRNGKey(0)
    k1, k2 = jax.random.split(key)
    logits = jax.random.normal(k1, (batch, num_classes), dtype=jnp.float32)
    labels = jax.random.randint(k2, (batch,), 0, num_classes, dtype=jnp.int32)

    # small max_tile_rows only to exercise the multi-tile + dual-partial path
    # at demo scale; production default (2048) picks VMEM-sized tiles.
    loss_fn = CustomLossFunction(num_classes, max_tile_rows=16)
    loss = loss_fn(logits, labels)
    jax.block_until_ready(loss)

    ref = _reference(logits, labels)
    assert jnp.allclose(loss, ref, rtol=1e-5, atol=1e-5), (loss, ref)

    print("KERNEL_OK")
</pallas_src>

<mosaic_0001>
module attributes {stable_mosaic.version = 11 : i64} {
  func.func @_ce_partial_kernel(%arg0: i32, %arg1: i32, %arg2: memref<16x32xf32, #tpu.memory_space<vmem>>, %arg3: memref<16x1xi32, #tpu.memory_space<vmem>>, %arg4: memref<1x128xf32, #tpu.memory_space<vmem>>, %arg5: memref<1x128xf32, #tpu.memory_space<vmem>>) attributes {dimension_semantics = [#tpu.dimension_semantics<parallel>, #tpu.dimension_semantics<arbitrary>], iteration_bounds = array<i64: 2, 2>, scalar_prefetch = 0 : i64, scratch_operands = 1 : i64, tpu.core_type = #tpu.core_type<tc>, window_params = [{transform_indices = @transform_0, window_bounds = array<i64: 16, 32>}, {transform_indices = @transform_1, window_bounds = array<i64: 16, 1>}, {transform_indices = @transform_2, window_bounds = array<i64: 1, 128>}]} {
    %c0_i32 = arith.constant 0 : i32
    %0 = arith.cmpi eq, %arg1, %c0_i32 : i32
    %1 = arith.extui %0 : i1 to i32
    %c0_i32_0 = arith.constant 0 : i32
    %2 = arith.cmpi ne, %1, %c0_i32_0 : i32
    scf.if %2 {
      %cst_15 = arith.constant 0.000000e+00 : f32
      %37 = vector.broadcast %cst_15 : f32 to vector<1x128xf32>
      %c0_16 = arith.constant 0 : index
      %c0_17 = arith.constant 0 : index
      %38 = vector.load %arg5[%c0_16, %c0_17] : memref<1x128xf32, #tpu.memory_space<vmem>>, vector<1x128xf32>
      tpu.vector_store %arg5[%c0_16, %c0_17], %37 {strides = array<i32>} : memref<1x128xf32, #tpu.memory_space<vmem>>, vector<1x128xf32>,
    } else {
    }
    %c0 = arith.constant 0 : index
    %c0_1 = arith.constant 0 : index
    %3 = vector.load %arg2[%c0, %c0_1] : memref<16x32xf32, #tpu.memory_space<vmem>>, vector<16x32xf32>
    %c0_2 = arith.constant 0 : index
    %c0_3 = arith.constant 0 : index
    %4 = vector.load %arg3[%c0_2, %c0_3] : memref<16x1xi32, #tpu.memory_space<vmem>>, vector<16x1xi32>
    %cst = arith.constant dense<0xFF800000> : vector<16xf32>
    %5 = vector.multi_reduction <maximumf>, %3, %cst [1] : vector<16x32xf32> to vector<16xf32>
    %6 = vector.shape_cast %5 : vector<16xf32> to vector<16x1xf32>
    %7 = vector.broadcast %6 : vector<16x1xf32> to vector<16x32xf32>
    %8 = arith.subf %3, %7 : vector<16x32xf32>
    %9 = math.exp %8 : vector<16x32xf32>
    %cst_4 = arith.constant dense<0.000000e+00> : vector<16xf32>
    %10 = vector.multi_reduction <add>, %9, %cst_4 [1] : vector<16x32xf32> to vector<16xf32>
    %11 = vector.shape_cast %10 : vector<16xf32> to vector<16x1xf32>
    %12 = math.log %11 : vector<16x1xf32>
    %13 = arith.addf %6, %12 : vector<16x1xf32>
    %14 = tpu.iota {dimensions = array<i32: 1>} : vector<16x32xi32>
    %15 = vector.broadcast %4 : vector<16x1xi32> to vector<16x32xi32>
    %16 = arith.cmpi eq, %14, %15 : vector<16x32xi32>
    %cst_5 = arith.constant 0.000000e+00 : f32
    %17 = vector.broadcast %cst_5 : f32 to vector<16x32xf32>
    %18 = arith.select %16, %3, %17 : vector<16x32xi1>, vector<16x32xf32>
    %cst_6 = arith.constant dense<0.000000e+00> : vector<16xf32>
    %19 = vector.multi_reduction <add>, %18, %cst_6 [1] : vector<16x32xf32> to vector<16xf32>
    %20 = vector.shape_cast %19 : vector<16xf32> to vector<16x1xf32>
    %c0_i32_7 = arith.constant 0 : i32
    %21 = vector.broadcast %c0_i32_7 : i32 to vector<16x1xi32>
    %22 = arith.cmpi sge, %4, %21 : vector<16x1xi32>
    %23 = arith.subf %13, %20 : vector<16x1xf32>
    %cst_8 = arith.constant 0.000000e+00 : f32
    %24 = vector.broadcast %cst_8 : f32 to vector<16x1xf32>
    %25 = arith.select %22, %23, %24 : vector<16x1xi1>, vector<16x1xf32>
    %c0_9 = arith.constant 0 : index
    %c0_10 = arith.constant 0 : index
    %26 = vector.load %arg5[%c0_9, %c0_10] : memref<1x128xf32, #tpu.memory_space<vmem>>, vector<1x128xf32>
    %27 = vector.shape_cast %25 : vector<16x1xf32> to vector<1x16x1xf32>
    %cst_11 = arith.constant dense<0.000000e+00> : vector<1xf32>
    %28 = vector.multi_reduction <add>, %27, %cst_11 [1, 2] : vector<1x16x1xf32> to vector<1xf32>
    %29 = vector.shape_cast %28 : vector<1xf32> to vector<1x1x1xf32>
    %30 = vector.extract %29[0, 0, 0] : f32 from vector<1x1x1xf32>
    %31 = vector.broadcast %30 : f32 to vector<1x128xf32>
    %32 = arith.addf %26, %31 : vector<1x128xf32>
    %c0_12 = arith.constant 0 : index
    %c0_13 = arith.constant 0 : index
    %33 = vector.load %arg5[%c0_12, %c0_13] : memref<1x128xf32, #tpu.memory_space<vmem>>, vector<1x128xf32>
    tpu.vector_store %arg5[%c0_12, %c0_13], %32 {strides = array<i32>} : memref<1x128xf32, #tpu.memory_space<vmem>>, vector<1x128xf32>,
    %c1_i32 = arith.constant 1 : i32
    %34 = arith.cmpi eq, %arg1, %c1_i32 : i32
    %35 = arith.extui %34 : i1 to i32
    %c0_i32_14 = arith.constant 0 : i32
    %36 = arith.cmpi ne, %35, %c0_i32_14 : i32
    scf.if %36 {
      %c0_15 = arith.constant 0 : index
      %c0_16 = arith.constant 0 : index
      %37 = vector.load %arg5[%c0_15, %c0_16] : memref<1x128xf32, #tpu.memory_space<vmem>>, vector<1x128xf32>
      %c0_17 = arith.constant 0 : index
      %c0_18 = arith.constant 0 : index
      %38 = vector.load %arg4[%c0_17, %c0_18] : memref<1x128xf32, #tpu.memory_space<vmem>>, vector<1x128xf32>
      tpu.vector_store %arg4[%c0_17, %c0_18], %37 {strides = array<i32>} : memref<1x128xf32, #tpu.memory_space<vmem>>, vector<1x128xf32>,
    } else {
    }
    return
  }
  func.func @transform_0(%arg0: i32, %arg1: i32) -> (i32, i32) {
    %c2_i32 = arith.constant 2 : i32
    %0 = arith.muli %arg0, %c2_i32 : i32
    %1 = arith.addi %0, %arg1 : i32
    %c0_i32 = arith.constant 0 : i32
    %c0_i32_0 = arith.constant 0 : i32
    return %1, %c0_i32 : i32, i32
  }
  func.func @transform_1(%arg0: i32, %arg1: i32) -> (i32, i32) {
    %c2_i32 = arith.constant 2 : i32
    %0 = arith.muli %arg0, %c2_i32 : i32
    %1 = arith.addi %0, %arg1 : i32
    %c0_i32 = arith.constant 0 : i32
    %c0_i32_0 = arith.constant 0 : i32
    return %1, %c0_i32 : i32, i32
  }
  func.func @transform_2(%arg0: i32, %arg1: i32) -> (i32, i32) {
    %c0_i32 = arith.constant 0 : i32
    %c0_i32_0 = arith.constant 0 : i32
    return %c0_i32, %arg0 : i32, i32
  }
}

</mosaic_0001>

<llo_original>
// kernel: tpu_custom_call.1
$region0: #{tpu_custom_call.1}
  #allocation0 [shape = 'u32[]', space=smem, size = 0x4, offset = 0x4, fixed_abs, tag = 'smem constant byte address 0x4 - core index']
  #allocation1 [shape = 'u32[144,128]{1,0:T(1,128)}', space=vmem, size = 0x12000, scoped, tag = 'internal scratch']
  #allocation2 [shape = 'f32[1,128]{1,0:T(1,128)}', space=vmem, size = 0x200, scoped, tag = 'scratch operand']
  %s0 = inlined_call_operand.vmem [shape: f32[64,32], index: 0, kind: input, shape index: {}]
  %s1 = inlined_call_operand.vmem [shape: s32[64,1], index: 1, kind: input, shape index: {}]
  %s2 = inlined_call_operand.hbm [shape: f32[1,256], index: 2, kind: output, shape index: {}]
  %s3 = sld [smem:[#allocation0]]
  $region49: #{tpu_custom_call.1} parent=0
    _
  %s5 = ssub.s32 1, %s3
  %s6 = scalar_select 0, %s5, %s3
  $region1: #{tpu_custom_call.1} parent=0
    #allocation3 [shape = 'u8[1024]{0}', space=vmem, size = 0x400, scoped, tag = 'output window, operand 0']
    #allocation4 [shape = 's32[2]{0}', space=sflag, size = 0x8, scoped, tag = 'scoped memory for tpu_custom_call.1']
    %7 = vsyncpa [#allocation4], 0
    %s8 = scalar_lea.sflag [#allocation4], 1
    %9 = vsyncpa %s8, 0
    loop: start=0, step=1, limit=6
    $region2: #{tpu_custom_call.1} parent=1 // loop_pre_header
      _
    $region3: #{tpu_custom_call.1} parent=1 // loop_header
      %s11 = sphi 0, %s15
      %p12 = scmp.ge.s32.totalorder %s11, 6
      %s18 = sphi 0, %s30
      %s19 = sphi 0, %s26
      %s20 = sphi 0, %s18
      %s21 = sphi 0, %s19
      %s22 = sphi 0, %s20
      %s23 = sphi 0, %s21
      %s37 = sphi 0, %s39
      %s40 = sphi 0, %s37
      %s41 = sphi 0, %s40
      %s57 = sphi 0, %s41
      %s67 = sphi 0, %s69
      %s70 = sphi 0, %s67
      %s71 = sphi 0, %s70
      %s87 = sphi 0, %s71
      %s93 = sphi 0, %s95
      %s96 = sphi 0, %s93
      %s97 = sphi 0, %s96
      %s113 = sphi 0, %s97
    $region4: #{tpu_custom_call.1} parent=1 // loop_header_branch
      %14 = sbr.rel (%p12) target = $region8
    $region5: #{tpu_custom_call.1} parent=1 // loop_body
      %s16 = ssub.s32 %s11, 1
      %s17 = ssub.s32 %s11, 2
      %s24 = sadd.s32 1, %s19
      %p25 = scmp.ge.s32.totalorder %s24, 2
      %s26 = scalar_select %p25, 0, %s24
      %s27 = sadd.s32 1, %s18
      %s28 = scalar_select %p25, %s27, %s18
      %p29 = scmp.ge.s32.totalorder %s28, 2
      %s30 = scalar_select %p29, 0, %s28
      %s31 = smul.u32 %s18, 2
      %s32 = sadd.s32 %s31, %s19
      %s33 = smul.u32 %s30, 2
      %s34 = sadd.s32 %s33, %s26
      %s35 = ssub.s32 %s32, %s34
      %p36 = scmp.eq.s32.totalorder %s35, 0
      %s38 = sadd.s32 %s37, 1
      %s39 = scalar_select %p36, %s37, %s38
      %p42 = pneg %p36
      %p43 = scmp.eq.s32.totalorder %s11, 3
      %p44 = por %p42, %p43
      %p45 = scmp.ne.s32.totalorder %s37, %s40
      %p46 = scmp.eq.s32.totalorder %s11, 0
      %p47 = por %p45, %p46
      %p48 = scmp.ne.s32.totalorder %s37, %s40
      %p49 = scmp.eq.s32.totalorder %s16, 3
      %p50 = por %p48, %p49
      %p51 = scmp.ne.s32.totalorder %s40, %s41
      %p52 = scmp.eq.s32.totalorder %s16, 0
      %p53 = por %p51, %p52
      %p54 = scmp.ne.s32.totalorder %s40, %s41
      %p55 = scmp.eq.s32.totalorder %s17, 3
      %p56 = por %p54, %p55
      %p58 = scmp.ne.s32.totalorder %s41, %s57
      %p59 = scmp.eq.s32.totalorder %s17, 0
      %p60 = por %p58, %p59
      %s61 = smul.u32 %s18, 2
      %s62 = sadd.s32 %s61, %s19
      %s63 = smul.u32 %s30, 2
      %s64 = sadd.s32 %s63, %s26
      %s65 = ssub.s32 %s62, %s64
      %p66 = scmp.eq.s32.totalorder %s65, 0
      %s68 = sadd.s32 %s67, 1
      %s69 = scalar_select %p66, %s67, %s68
      %p72 = pneg %p66
      %p73 = scmp.eq.s32.totalorder %s11, 3
      %p74 = por %p72, %p73
      %p75 = scmp.ne.s32.totalorder %s67, %s70
      %p76 = scmp.eq.s32.totalorder %s11, 0
      %p77 = por %p75, %p76
      %p78 = scmp.ne.s32.totalorder %s67, %s70
      %p79 = scmp.eq.s32.totalorder %s16, 3
      %p80 = por %p78, %p79
      %p81 = scmp.ne.s32.totalorder %s70, %s71
      %p82 = scmp.eq.s32.totalorder %s16, 0
      %p83 = por %p81, %p82
      %p84 = scmp.ne.s32.totalorder %s70, %s71
      %p85 = scmp.eq.s32.totalorder %s17, 3
      %p86 = por %p84, %p85
      %p88 = scmp.ne.s32.totalorder %s71, %s87
      %p89 = scmp.eq.s32.totalorder %s17, 0
      %p90 = por %p88, %p89
      %s91 = ssub.s32 %s18, %s30
      %p92 = scmp.eq.s32.totalorder %s91, 0
      %s94 = sadd.s32 %s93, 1
      %s95 = scalar_select %p92, %s93, %s94
      %p98 = pneg %p92
      %p99 = scmp.eq.s32.totalorder %s11, 3
      %p100 = por %p98, %p99
      %p101 = scmp.ne.s32.totalorder %s93, %s96
      %p102 = scmp.eq.s32.totalorder %s11, 0
      %p103 = por %p101, %p102
      %p104 = scmp.ne.s32.totalorder %s93, %s96
      %p105 = scmp.eq.s32.totalorder %s16, 3
      %p106 = por %p104, %p105
      %p107 = scmp.ne.s32.totalorder %s96, %s97
      %p108 = scmp.eq.s32.totalorder %s16, 0
      %p109 = por %p107, %p108
      %p110 = scmp.ne.s32.totalorder %s96, %s97
      %p111 = scmp.eq.s32.totalorder %s17, 3
      %p112 = por %p110, %p111
      %p114 = scmp.ne.s32.totalorder %s97, %s113
      %p115 = scmp.eq.s32.totalorder %s17, 0
      %p116 = por %p114, %p115
      %p117 = scmp.le.s32.totalorder 1, %s11
      %p118 = scmp.lt.s32.totalorder %s11, 5
      %p119 = pnand %p117, %p118
      %p120 = pneg %p119
      // Predicated region
      $region9: #{tpu_custom_call.1} parent=5 // pred_check
        _
      $region10: #{tpu_custom_call.1} parent=5 // pred_check_branch
        %122 = sbr.rel (%p119) target = $region12
      $region11: #{tpu_custom_call.1} parent=5 // pred_region
        %s123 = ssub.s32 %s11, 1
      $region12: #{tpu_custom_call.1} parent=5 // pred_fallthru
        _
      %p124 = scmp.lt.s32.totalorder %s11, 4
      // Predicated region
      $region13: #{tpu_custom_call.1} parent=5 // pred_check
        %p125 = pneg %p124
      $region14: #{tpu_custom_call.1} parent=5 // pred_check_branch
        %127 = sbr.rel (%p125) target = $region16
      $region15: #{tpu_custom_call.1} parent=5 // pred_region
        // Predicated region
        $region17: #{tpu_custom_call.1} parent=15 // pred_check
          %p128 = pneg %p47
        $region18: #{tpu_custom_call.1} parent=15 // pred_check_branch
          %130 = sbr.rel (%p128) target = $region20
        $region19: #{tpu_custom_call.1} parent=15 // pred_region
          %s131 = smul.u32 %s18, 2
          %s132 = sadd.s32 %s131, %s19
          %s133 = smul.u32 2, %s132
          %p134 = scmp.lt.s32.totalorder %s133, 7
          %s135 = scalar_select %p134, %s133, 7
          %s136 = smul.addr %s135, 8
          %s137 = scalar_lea.vmem %s0, %s136
          %s138 = smul.u32 %s18, 2
          %s139 = sadd.s32 %s138, %s19
          %s140 = smul.u32 2, %s139
        $region20: #{tpu_custom_call.1} parent=15 // pred_fallthru
          _
        // Predicated region
        $region21: #{tpu_custom_call.1} parent=15 // pred_check
          %p141 = pneg %p77
        $region22: #{tpu_custom_call.1} parent=15 // pred_check_branch
          %143 = sbr.rel (%p141) target = $region24
        $region23: #{tpu_custom_call.1} parent=15 // pred_region
          %s144 = smul.u32 %s18, 2
          %s145 = sadd.s32 %s144, %s19
          %s146 = smul.u32 2, %s145
          %p147 = scmp.lt.s32.totalorder %s146, 7
          %s148 = scalar_select %p147, %s146, 7
          %s149 = smul.addr %s148, 8
          %s150 = scalar_lea.vmem %s1, %s149
          %s151 = smul.u32 %s18, 2
          %s152 = sadd.s32 %s151, %s19
          %s153 = smul.u32 2, %s152
        $region24: #{tpu_custom_call.1} parent=15 // pred_fallthru
          _
      $region16: #{tpu_custom_call.1} parent=5 // pred_fallthru
        _
      %p154 = scmp.le.s32.totalorder 1, %s11
      %p155 = scmp.lt.s32.totalorder %s11, 5
      %p156 = pnand %p154, %p155
      %p157 = pneg %p156
      // Predicated region
      $region25: #{tpu_custom_call.1} parent=5 // pred_check
        _
      $region26: #{tpu_custom_call.1} parent=5 // pred_check_branch
        %159 = sbr.rel (%p156) target = $region28
      $region27: #{tpu_custom_call.1} parent=5 // pred_region
        %s160 = ssub.s32 %s11, 1
        %s161 = smul.u32 %s20, 2
        %s162 = sadd.s32 %s161, %s21
        %s163 = smul.u32 2, %s162
        %p164 = scmp.lt.s32.totalorder %s163, 7
        %s165 = scalar_select %p164, %s163, 7
        %s166 = smul.addr %s165, 8
        %s167 = scalar_lea.vmem %s0, %s166
        %p168 = pneg %p53
        %p169 = pneg %p50
        %s170 = smul.u32 %s20, 2
        %s171 = sadd.s32 %s170, %s21
        %s172 = smul.u32 2, %s171
        %p173 = scmp.lt.s32.totalorder %s172, 7
        %s174 = scalar_select %p173, %s172, 7
        %s175 = smul.addr %s174, 8
        %s176 = scalar_lea.vmem %s1, %s175
        %p177 = pneg %p83
        %p178 = pneg %p80
        %p179 = pneg %p109
        %p180 = pneg %p106
        %s181 = sand.u32 %s96, 1
        %s182 = scalar_lea.sflag [#allocation4], %s181
        %s183 = sand.u32 %s96, 1
        %s184 = scalar_lea.vmem [#allocation3], %s183
        %s185 = smul.u32 %s20, 2
        %s186 = sadd.s32 %s185, %s21
        %s187 = smul.u32 2, %s186
        %p188 = scmp.lt.s32.totalorder %s187, 7
        %s189 = scalar_select %p188, %s187, 7
        %s190 = smul.addr %s189, 8
        %s191 = scalar_lea.vmem %s0, %s190
        %s192 = smul.u32 %s20, 2
        %s193 = sadd.s32 %s192, %s21
        %s194 = smul.u32 2, %s193
        %s195 = smul.u32 %s20, 2
        %s196 = sadd.s32 %s195, %s21
        %s197 = smul.u32 2, %s196
        %p198 = scmp.lt.s32.totalorder %s197, 7
        %s199 = scalar_select %p198, %s197, 7
        %s200 = smul.addr %s199, 8
        %s201 = scalar_lea.vmem %s1, %s200
        %s202 = smul.u32 %s20, 2
        %s203 = sadd.s32 %s202, %s21
        %s204 = smul.u32 2, %s203
        %p205 = scmp.eq.s32.totalorder %s21, 0
        // Predicated region
        $region29: #{tpu_custom_call.1} parent=27 // pred_check
          %p206 = pneg %p205
        $region30: #{tpu_custom_call.1} parent=27 // pred_check_branch
          %208 = sbr.rel (%p206) target = $region32
        $region31: #{tpu_custom_call.1} parent=27 // pred_region
          %209 = vst [vmem:[#allocation2] sm:$0x1] 0.0
        $region32: #{tpu_custom_call.1} parent=27 // pred_fallthru
          _
        %v210 = vld [vmem:[%s191] sm:$0xff]
        %v211 = vld [vmem:[%s191 + $0x8] sm:$0xff]
        %v212 = vld [vmem:[%s201] sm:$0xff]
        %v213 = vld [vmem:[%s201 + $0x8] sm:$0xff]
        %vm214 = vcmask 261120
        %v215 = vsel %vm214, %v210, -inf
        %216 = vmax.xlane.f32.xlu0 %v215
        %v217 = vpop.xlane.xlu0 %216
        %v218 = vsel %vm214, %v211, -inf
        %219 = vmax.xlane.f32.xlu0 %v218
        %v220 = vpop.xlane.xlu0 %219
        %v221 = vsub.f32 %v210, %v217
        %v222 = vsub.f32 %v211, %v220
        %v223 = vmul.f32 %v221, 1.442695
        %v224 = vpow.pop %v223
        %v225 = vmul.f32 %v222, 1.442695
        %v226 = vpow.pop %v225
        %v227 = vsel %vm214, %v224, 0.0
        %228 = vadd.xlane.f32.xlu0 %v227
        %v229 = vpop.xlane.xlu0 %228
        %v230 = vsel %vm214, %v226, 0.0
        %231 = vadd.xlane.f32.xlu0 %v230
        %v232 = vpop.xlane.xlu0 %231
        %v233 = vlog2.pop %v229
        %v234 = vmul.f32 %v233, 0.6931472
        %v235 = vlog2.pop %v232
        %v236 = vmul.f32 %v235, 0.6931472
        %v237 = vadd.f32 %v217, %v234
        %v238 = vadd.f32 %v220, %v236
        %v239 = vlaneseq
        %v240 = vand.u32 %v239, 127
        %241 = vset.pattern.permute.xlu0 0
        %242 = vperm.xlu0 %241, %v212
        %v243 = vpop.permute.xlu0 %242
        %244 = vset.pattern.permute.xlu0 0
        %245 = vperm.xlu0 %244, %v213
        %v246 = vpop.permute.xlu0 %245
        %vm247 = vcmp.eq.s32.totalorder %v240, %v243
        %vm248 = vcmp.eq.s32.totalorder %v240, %v246
        %v249 = vsel %vm247, %v210, 0.0
        %v250 = vsel %vm248, %v211, 0.0
        %v251 = vsel %vm214, %v249, 0.0
        %252 = vadd.xlane.f32.xlu0 %v251
        %v253 = vpop.xlane.xlu0 %252
        %v254 = vsel %vm214, %v250, 0.0
        %255 = vadd.xlane.f32.xlu0 %v254
        %v256 = vpop.xlane.xlu0 %255
        %vm257 = vcmp.ge.s32.totalorder %v212, 0
        %vm258 = vcmp.ge.s32.totalorder %v213, 0
        %v259 = vsub.f32 %v237, %v253
        %v260 = vsub.f32 %v238, %v256
        %v261 = vsel %vm257, %v259, 0.0
        %v262 = vsel %vm258, %v260, 0.0
        %v263 = vld [vmem:[#allocation2] sm:$0x1]
        %vm264 = vcmask 7168
        %v265 = vsel %vm264, %v261, 0.0
        %v266 = vsel %vm264, %v262, 0.0
        %v267 = vadd.f32 %v265, %v266
        %268 = vadd.xlane.f32.xlu0 %v267
        %v269 = vpop.xlane.xlu0 %268
        %v270 = vrot.slane %v269, 4
        %v271 = vadd.f32 %v269, %v270
        %v272 = vrot.slane %v271, 2
        %v273 = vadd.f32 %v271, %v272
        %v274 = vrot.slane %v273, 1
        %v275 = vadd.f32 %v273, %v274
        %s276 = vtos %v275
        %v277 = vstv %s276
        %v278 = vadd.f32 %v263, %v277
        %279 = vst [vmem:[#allocation2] sm:$0x1] %v278
        %p280 = scmp.eq.s32.totalorder %s21, 1
        // Predicated region
        $region33: #{tpu_custom_call.1} parent=27 // pred_check
          %p281 = pneg %p280
        $region34: #{tpu_custom_call.1} parent=27 // pred_check_branch
          %283 = sbr.rel (%p281) target = $region36
        $region35: #{tpu_custom_call.1} parent=27 // pred_region
          %v284 = vld [vmem:[#allocation2] sm:$0x1]
          %285 = vst [vmem:[%s184] sm:$0x1] %v284
        $region36: #{tpu_custom_call.1} parent=27 // pred_fallthru
          _
        %s286 = sand.u32 %s96, 1
        %s287 = scalar_lea.sflag [#allocation4], %s286
        %s288 = sand.u32 %s96, 1
        %s289 = scalar_lea.vmem [#allocation3], %s288
        // Predicated region
        $region37: #{tpu_custom_call.1} parent=27 // pred_check
          %p290 = pneg %p106
        $region38: #{tpu_custom_call.1} parent=27 // pred_check_branch
          %292 = sbr.rel (%p290) target = $region40
        $region39: #{tpu_custom_call.1} parent=27 // pred_region
          %s294 = ssub.s32 16, 16
          %295 = vsyncadd %s287, %s294
          %s296 = smul.addr %s20, 16
          %s297 = scalar_lea.hbm %s2, %s296
          %s299 = sshll.u32 %s289, 4
          %s300 = int_to_ptr.vmem [resolvable:$true] %s299
          %302 = dma.vmem_to_hbm [thread:$0]  %s300, 16, %s297, %s287
        $region40: #{tpu_custom_call.1} parent=27 // pred_fallthru
          _
      $region28: #{tpu_custom_call.1} parent=5 // pred_fallthru
        _
      %p303 = scmp.le.s32.totalorder 2, %s11
      // Predicated region
      $region41: #{tpu_custom_call.1} parent=5 // pred_check
        %p304 = pneg %p303
      $region42: #{tpu_custom_call.1} parent=5 // pred_check_branch
        %306 = sbr.rel (%p304) target = $region44
      $region43: #{tpu_custom_call.1} parent=5 // pred_region
        %s307 = ssub.s32 %s11, 2
        // Predicated region
        $region45: #{tpu_custom_call.1} parent=43 // pred_check
          %p308 = pneg %p112
        $region46: #{tpu_custom_call.1} parent=43 // pred_check_branch
          %310 = sbr.rel (%p308) target = $region48
        $region47: #{tpu_custom_call.1} parent=43 // pred_region
          %s311 = sand.u32 %s97, 1
          %s312 = scalar_lea.sflag [#allocation4], %s311
          %s313 = sand.u32 %s97, 1
          %s314 = scalar_lea.vmem [#allocation3], %s313
          %315 = dma.done %s312, 16
        $region48: #{tpu_custom_call.1} parent=43 // pred_fallthru
          _
      $region44: #{tpu_custom_call.1} parent=5 // pred_fallthru
        _
    $region6: #{tpu_custom_call.1} parent=1 // loop_footer
      %s15 = sadd.s32 1, %s11
    $region7: #{tpu_custom_call.1} parent=1 // loop_footer_branch
      %10 = sbr.rel target = $region3
    $region8: #{tpu_custom_call.1} parent=1 // loop_exit
      _
    %316 = vsyncpa [#allocation4], 1
    %s317 = scalar_lea.sflag [#allocation4], 1
    %318 = vsyncpa %s317, 1

</llo_original>
